<compile_context>
chip_gen: v6e
topology: v6e:2x2x1
jax: 0.10.0
libtpu: 0.0.40
codegen_flags: <defaults>
</compile_context>

<pallas_src>
import functools

import jax
import jax.numpy as jnp
from jax import lax
from jax.experimental import pallas as pl
from jax.experimental.pallas import tpu as pltpu

# ---- small shapes consistent with the module --------------------------------
N = 2            # batch
C = 4            # num_channels
H = W = 16       # spatial
P = 4            # patch_size
D_MODEL = 32     # d_model
N_PATCH = (H // P) * (W // P)    # 16 patches per image
K = C * P * P                    # 64 = flattened patch length


def patch_embed_kernel(patches_ref, w_ref, b_ref, o_ref):
    """One fused MXU pass: (M, K) contracted with (D, K) on K, plus bias."""
    acc = lax.dot_general(
        patches_ref[...], w_ref[...],
        dimension_numbers=(((1,), (1,)), ((), ())),   # K (lhs dim1) x K (rhs dim1)
        preferred_element_type=jnp.float32,
    )
    o_ref[...] = (acc + b_ref[...]).astype(o_ref.dtype)


def prepare_projection_params(conv_w, conv_b):
    """One-time parameter prep; cache the result across steps.

    Contiguous (metadata-only) reshapes — no transpose, no extra HBM traffic."""
    d_model = conv_w.shape[0]
    return conv_w.reshape(d_model, -1), conv_b.reshape(1, d_model)


@functools.partial(jax.jit, static_argnames=("patch_size",))
def linear_projection(x, w_dk, b_1d, patch_size=P):
    """x: (N, C, H, W); w_dk: (d_model, C*P*P); b_1d: (1, d_model)
    -> (N, num_patches, d_model), identical to the PyTorch module."""
    n, c, h, w = x.shape
    hp, wp = h // patch_size, w // patch_size
    d_model = w_dk.shape[0]
    k = c * patch_size * patch_size
    m = n * hp * wp

    # im2col (stride==kernel conv is exactly a patch matmul):
    # (N,C,H,W) -> (N,C,hp,P,wp,P) -> (N,hp,wp,C,P,P) -> (M, K).
    # Row order (n, i, j) matches Conv2d's raster order, so the final reshape
    # below reproduces reshape(N, d_model, -1).transpose(1, 2).
    # Kept in the wrapper (see TODO(synk) above); it is one XLA transpose
    # fusion inside this jit, ~16 KB of HBM traffic at these shapes.
    patches = (
        x.reshape(n, c, hp, patch_size, wp, patch_size)
         .transpose(0, 2, 4, 1, 3, 5)
         .reshape(m, k)
    )

    out = pl.pallas_call(
        patch_embed_kernel,
        out_shape=jax.ShapeDtypeStruct((m, d_model), x.dtype),
        # No grid: single invocation, whole operands resident in VMEM
        # (<20 KB total), no pipeline double-buffering scaffolding.
        in_specs=[
            pl.BlockSpec(memory_space=pltpu.MemorySpace.VMEM),   # patches (M, K)
            pl.BlockSpec(memory_space=pltpu.MemorySpace.VMEM),   # weight  (D, K)
            pl.BlockSpec(memory_space=pltpu.MemorySpace.VMEM),   # bias    (1, D)
        ],
        out_specs=pl.BlockSpec(memory_space=pltpu.MemorySpace.VMEM),
    )(patches, w_dk, b_1d)

    # Free (contiguous) reshape to the module's (N, num_patches, d_model).
    return out.reshape(n, hp * wp, d_model)


# ---- plain-JAX reference (real strided conv, for a sanity check) -------------
def linear_projection_ref(x, conv_w, conv_b, patch_size=P):
    out = lax.conv_general_dilated(
        x, conv_w,
        window_strides=(patch_size, patch_size),
        padding="VALID",
        dimension_numbers=("NCHW", "OIHW", "NCHW"),
    ) + conv_b.reshape(1, -1, 1, 1)
    n, d_model = out.shape[0], out.shape[1]
    out = out.reshape(n, d_model, -1)          # (N, d_model, num_patches)
    return jnp.transpose(out, (0, 2, 1))       # (N, num_patches, d_model)


if __name__ == "__main__":
    key = jax.random.PRNGKey(0)
    kx, kw, kb = jax.random.split(key, 3)

    x = jax.random.normal(kx, (N, C, H, W), dtype=jnp.float32)
    conv_w = (0.1 * jax.random.normal(kw, (D_MODEL, C, P, P))).astype(jnp.float32)
    conv_b = (0.1 * jax.random.normal(kb, (D_MODEL,))).astype(jnp.float32)

    # One-time prep (weights are constant between optimizer steps -> cache).
    w_dk, b_1d = prepare_projection_params(conv_w, conv_b)

    out = linear_projection(x, w_dk, b_1d)
    out = jax.block_until_ready(out)

    ref = linear_projection_ref(x, conv_w, conv_b)
    assert out.shape == (N, N_PATCH, D_MODEL)
    assert jnp.allclose(out, ref, atol=1e-4, rtol=1e-4)

    print("KERNEL_OK")
</pallas_src>

<mosaic_0001>
module attributes {stable_mosaic.version = 11 : i64} {
  func.func @patch_embed_kernel(%arg0: memref<32x64xf32, #tpu.memory_space<vmem>>, %arg1: memref<32x64xf32, #tpu.memory_space<vmem>>, %arg2: memref<1x32xf32, #tpu.memory_space<vmem>>, %arg3: memref<32x32xf32, #tpu.memory_space<vmem>>) attributes {dimension_semantics = [], scalar_prefetch = 0 : i64, scratch_operands = 0 : i64, tpu.core_type = #tpu.core_type<tc>} {
    %c0 = arith.constant 0 : index
    %c0_0 = arith.constant 0 : index
    %0 = vector.load %arg0[%c0, %c0_0] : memref<32x64xf32, #tpu.memory_space<vmem>>, vector<32x64xf32>
    %c0_1 = arith.constant 0 : index
    %c0_2 = arith.constant 0 : index
    %1 = vector.load %arg1[%c0_1, %c0_2] : memref<32x64xf32, #tpu.memory_space<vmem>>, vector<32x64xf32>
    %cst = arith.constant dense<0.000000e+00> : vector<32x32xf32>
    %2 = tpu.matmul %0, %1, %cst {dimension_numbers = #tpu.dot_dimension_numbers<[1], [1], [0], [0], [0, 0, 1, 0], [], []>} : vector<32x64xf32>, vector<32x64xf32>, vector<32x32xf32> -> vector<32x32xf32>
    %c0_3 = arith.constant 0 : index
    %c0_4 = arith.constant 0 : index
    %3 = vector.load %arg2[%c0_3, %c0_4] : memref<1x32xf32, #tpu.memory_space<vmem>>, vector<1x32xf32>
    %4 = vector.broadcast %3 : vector<1x32xf32> to vector<32x32xf32>
    %5 = arith.addf %2, %4 : vector<32x32xf32>
    %c0_5 = arith.constant 0 : index
    %c0_6 = arith.constant 0 : index
    %6 = vector.load %arg3[%c0_5, %c0_6] : memref<32x32xf32, #tpu.memory_space<vmem>>, vector<32x32xf32>
    tpu.vector_store %arg3[%c0_5, %c0_6], %5 {strides = array<i32>} : memref<32x32xf32, #tpu.memory_space<vmem>>, vector<32x32xf32>,
    return
  }
}

</mosaic_0001>

<llo_original>
// kernel: linear_projection.1
$region0: #{linear_projection.1}
  #allocation0 [shape = 'u32[]', space=smem, size = 0x4, offset = 0x4, fixed_abs, tag = 'smem constant byte address 0x4 - core index']
  #allocation1 [shape = 'u32[144,128]{1,0:T(1,128)}', space=vmem, size = 0x12000, scoped, tag = 'internal scratch']
  %s0 = inlined_call_operand.vmem [shape: f32[32,64], index: 0, kind: input, shape index: {}]
  %s1 = inlined_call_operand.vmem [shape: f32[32,64], index: 1, kind: input, shape index: {}]
  %s2 = inlined_call_operand.vmem [shape: f32[1,32], index: 2, kind: input, shape index: {}]
  %s3 = inlined_call_operand.hbm [shape: f32[32,32], index: 3, kind: output, shape index: {}]
  %s4 = sld [smem:[#allocation0]]
  $region22: #{linear_projection.1} parent=0
    _
  %s6 = ssub.s32 1, %s4
  %s7 = scalar_select 0, %s6, %s4
  $region1: #{linear_projection.1} parent=0
    #allocation2 [shape = 'u8[16384]{0}', space=vmem, size = 0x4000, scoped, tag = 'output window, operand 0, single buffered']
    #allocation3 [shape = 's32[1]{0}', space=sflag, size = 0x4, scoped, tag = 'scoped memory for linear_projection.1']
    %8 = vsyncpa [#allocation3], 0
    // Predicated region
    $region2: #{linear_projection.1} parent=1 // pred_check
      _
    $region3: #{linear_projection.1} parent=1 // pred_check_branch
      %10 = sbr.rel (0) target = $region5
    $region4: #{linear_projection.1} parent=1 // pred_region
      _
    $region5: #{linear_projection.1} parent=1 // pred_fallthru
      _
    // Predicated region
    $region6: #{linear_projection.1} parent=1 // pred_check
      _
    $region7: #{linear_projection.1} parent=1 // pred_check_branch
      %12 = sbr.rel (0) target = $region9
    $region8: #{linear_projection.1} parent=1 // pred_region
      _
    $region9: #{linear_projection.1} parent=1 // pred_fallthru
      _
    // Predicated region
    $region10: #{linear_projection.1} parent=1 // pred_check
      _
    $region11: #{linear_projection.1} parent=1 // pred_check_branch
      %14 = sbr.rel (0) target = $region13
    $region12: #{linear_projection.1} parent=1 // pred_region
      _
    $region13: #{linear_projection.1} parent=1 // pred_fallthru
      _
    %v15 = vld [vmem:[%s0] sm:$0xff]
    %v16 = vld [vmem:[%s0 + $0x8] sm:$0xff]
    %v17 = vld [vmem:[%s0 + $0x10] sm:$0xff]
    %v18 = vld [vmem:[%s0 + $0x18] sm:$0xff]
    %v19 = vld [vmem:[%s1] sm:$0xff]
    %v20 = vld [vmem:[%s1 + $0x8] sm:$0xff]
    %v21 = vld [vmem:[%s1 + $0x10] sm:$0xff]
    %v22 = vld [vmem:[%s1 + $0x18] sm:$0xff]
    %v23 = vld [vmem:[%s2] sm:$0x1]
    %v25 = vlaneseq
    %v26 = vshrl.u32 %v25, 7
    %v27 = vsub.s32 0, %v26
    %v28 = vrot.slane %v23, %v27
    %vm30 = vcmask 523264
    %v32 = vsel %vm30, %v15, 0
    %v35 = vsel %vm30, %v16, 0
    %v38 = vsel %vm30, %v17, 0
    %v41 = vsel %vm30, %v18, 0
    %v44 = vsel %vm30, %v19, 0
    %v47 = vsel %vm30, %v20, 0
    %v50 = vsel %vm30, %v21, 0
    %v53 = vsel %vm30, %v22, 0
    %55 = vmatprep.subr.mxu0 0.0
    %56 = vmatpush1.xpose.msra.mxu0 0.0
    %57 = vmatprep.subr.mxu0 0.0
    %58 = vmatpush1.xpose.msra.mxu0 0.0
    %59 = vmatprep.subr.mxu0 0.0
    %60 = vmatpush1.xpose.msra.mxu0 0.0
    %61 = vmatprep.subr.mxu0 0.0
    %62 = vmatpush1.xpose.msra.mxu0 0.0
    %63 = vmatprep.subr.mxu0 0.0
    %64 = vmatpush1.xpose.msra.mxu0 0.0
    %65 = vmatprep.subr.mxu0 0.0
    %66 = vmatpush1.xpose.msra.mxu0 0.0
    %67 = vmatprep.subr.mxu0 0.0
    %68 = vmatpush1.xpose.msra.mxu0 0.0
    %69 = vmatprep.subr.mxu0 0.0
    %70 = vmatpush1.xpose.msra.mxu0 0.0
    %71 = vmatprep.subr.mxu0 0.0
    %72 = vmatpush1.xpose.msra.mxu0 0.0
    %73 = vmatprep.subr.mxu0 0.0
    %74 = vmatpush1.xpose.msra.mxu0 0.0
    %75 = vmatprep.subr.mxu0 0.0
    %76 = vmatpush1.xpose.msra.mxu0 0.0
    %77 = vmatprep.subr.mxu0 0.0
    %78 = vmatpush1.xpose.msra.mxu0 0.0
    %79 = vmatprep.subr.mxu0 0.0
    %80 = vmatpush1.xpose.msra.mxu0 %v53
    %81 = vmatprep.subr.mxu0 0.0
    %82 = vmatpush1.xpose.msra.mxu0 %v50
    %83 = vmatprep.subr.mxu0 0.0
    %84 = vmatpush1.xpose.msra.mxu0 %v47
    %85 = vmatprep.subr.mxu0 0.0
    %86 = vmatpush1.xpose.msra.mxu0 %v44
    %87 = vmatprep.subr.mxu0 0.0
    %88 = vmatpush2.xpose.msra.mxu0 0.0
    %89 = vmatprep.subr.mxu0 0.0
    %90 = vmatpush2.xpose.msra.mxu0 0.0
    %91 = vmatprep.subr.mxu0 0.0
    %92 = vmatpush2.xpose.msra.mxu0 0.0
    %93 = vmatprep.subr.mxu0 0.0
    %94 = vmatpush2.xpose.msra.mxu0 0.0
    %95 = vmatprep.subr.mxu0 0.0
    %96 = vmatpush2.xpose.msra.mxu0 0.0
    %97 = vmatprep.subr.mxu0 0.0
    %98 = vmatpush2.xpose.msra.mxu0 0.0
    %99 = vmatprep.subr.mxu0 0.0
    %100 = vmatpush2.xpose.msra.mxu0 0.0
    %101 = vmatprep.subr.mxu0 0.0
    %102 = vmatpush2.xpose.msra.mxu0 0.0
    %103 = vmatprep.subr.mxu0 0.0
    %104 = vmatpush2.xpose.msra.mxu0 0.0
    %105 = vmatprep.subr.mxu0 0.0
    %106 = vmatpush2.xpose.msra.mxu0 0.0
    %107 = vmatprep.subr.mxu0 0.0
    %108 = vmatpush2.xpose.msra.mxu0 0.0
    %109 = vmatprep.subr.mxu0 0.0
    %110 = vmatpush2.xpose.msra.mxu0 0.0
    %111 = vmatprep.subr.mxu0 0.0
    %112 = vmatpush2.xpose.msra.mxu0 0.0
    %113 = vmatprep.subr.mxu0 0.0
    %114 = vmatpush2.xpose.msra.mxu0 0.0
    %115 = vmatprep.subr.mxu0 0.0
    %116 = vmatpush2.xpose.msra.mxu0 0.0
    %117 = vmatprep.subr.mxu0 0.0
    %118 = vmatpush2.xpose.msra.mxu0 0.0
    %119 = vmatprep.mubr.f32.mxu0 0.0
    %120 = vmatmul.mubr.f32.gmra.mxu0 %v32
    %v121 = vpop.f32.mrf.mxu0
    %v122 = vadd.f32 %v28, %v121
    %v123 = vpop.f32.mrf.mxu0
    %124 = vmatprep.mubr.f32.mxu0 0.0
    %125 = vmatmul.mubr.f32.gmra.mxu0 %v35
    %v126 = vpop.f32.mrf.mxu0
    %v127 = vadd.f32 %v28, %v126
    %v128 = vpop.f32.mrf.mxu0
    %129 = vmatprep.mubr.f32.mxu0 0.0
    %130 = vmatmul.mubr.f32.gmra.mxu0 %v38
    %v131 = vpop.f32.mrf.mxu0
    %v132 = vadd.f32 %v28, %v131
    %v133 = vpop.f32.mrf.mxu0
    %134 = vmatprep.mubr.f32.mxu0 0.0
    %135 = vmatmul.mubr.f32.gmra.mxu0 %v41
    %v136 = vpop.f32.mrf.mxu0
    %v137 = vadd.f32 %v28, %v136
    %v138 = vpop.f32.mrf.mxu0
    %139 = vdwg.mxu0
    %vm140 = vcmask 261120
    %141 = vst.msk [vmem:[#allocation2] sm:$0xff] %vm140, %v122
    %142 = vst.msk [vmem:[#allocation2 + $0x8] sm:$0xff] %vm140, %v127
    %143 = vst.msk [vmem:[#allocation2 + $0x10] sm:$0xff] %vm140, %v132
    %144 = vst.msk [vmem:[#allocation2 + $0x18] sm:$0xff] %vm140, %v137
    // Predicated region
    $region14: #{linear_projection.1} parent=1 // pred_check
      _
    $region15: #{linear_projection.1} parent=1 // pred_check_branch
      %146 = sbr.rel (0) target = $region17
    $region16: #{linear_projection.1} parent=1 // pred_region
      %s148 = ssub.s32 512, 512
      %149 = vsyncadd [#allocation3], %s148
      %s150 = sshll.u32 [#allocation2], 4
      %s151 = int_to_ptr.vmem [resolvable:$true] %s150
      %156 = dma.vmem_to_hbm [thread:$0]  %s151, 512, %s3, [#allocation3], 128, 128, 8
    $region17: #{linear_projection.1} parent=1 // pred_fallthru
      _
    // Predicated region
    $region18: #{linear_projection.1} parent=1 // pred_check
      _
    $region19: #{linear_projection.1} parent=1 // pred_check_branch
      %158 = sbr.rel (0) target = $region21
    $region20: #{linear_projection.1} parent=1 // pred_region
      %159 = dma.done [#allocation3], 512
    $region21: #{linear_projection.1} parent=1 // pred_fallthru
      _
    %160 = vsyncpa [#allocation3], 1

</llo_original>
